<compile_context>
chip_gen: v7x
topology: tpu7x:2x2x1
jax: 0.10.0
libtpu: 0.0.40
codegen_flags: <defaults>
</compile_context>

<pallas_src>
import functools
from typing import NamedTuple

import jax
import jax.numpy as jnp
from jax.experimental import pallas as pl
from jax.experimental.pallas import tpu as pltpu


# --------------------------------------------------------------------------------------
# Small helpers
# --------------------------------------------------------------------------------------
def _round_up(x: int, m: int) -> int:
    return ((x + m - 1) // m) * m


def _largest_div_tile(ext_p: int, unit: int, cap: int) -> int:
    """Largest multiple of `unit` that divides `ext_p` and is <= cap (>= unit)."""
    best = unit
    t = unit
    limit = min(ext_p, max(cap, unit))
    while t <= limit:
        if ext_p % t == 0:
            best = t
        t += unit
    return best


def _device_kind() -> str:
    try:
        return jax.devices()[0].device_kind.lower()
    except Exception:
        return ""


def _use_int8_mxu_default() -> bool:
    """v5/v6 TensorCores have a native int8 MXU path (exact int32 accumulation).
    Other generations (incl. v7x) use bf16 operands with f32 accumulation."""
    kind = _device_kind()
    return ("v5" in kind) or ("v6" in kind)


def _tensorcores_per_chip() -> int:
    return 2 if "v7" in _device_kind() else 1


def _vmem_limit_bytes() -> int:
    kind = _device_kind()
    if "v7" in kind:
        return 48 << 20          # 64 MiB physical per TC on v7x -> leave headroom
    if ("v4" in kind) or ("v5" in kind) or ("v6" in kind):
        return 64 << 20          # 128 MiB physical
    return 32 << 20


# --------------------------------------------------------------------------------------
# One-time weight-side preparation (plays the role of quantized.linear_prepack)
# --------------------------------------------------------------------------------------
class QLinearParams(NamedTuple):
    wt: jax.Array    # [Kp, Np] int8 : weight, pre-transposed, zero-padded to 128 multiples
    csum: jax.Array  # [1, Np]  int32: per-output-column sums of the original weight
    bias: jax.Array  # [1, Np]  f32  : bias / out_scale
    K: int
    N: int


def prepare_qlinear_params(w_q, bias, *, out_scale=1.0) -> QLinearParams:
    N, K = w_q.shape
    Kp, Np = _round_up(K, 128), _round_up(N, 128)          # pad only to the lane boundary

    wt = jnp.transpose(jnp.asarray(w_q, jnp.int8), (1, 0))  # [K, N]
    wt = jnp.pad(wt, ((0, Kp - K), (0, Np - N)))             # zero rows/cols -> exact

    csum = jnp.sum(w_q.astype(jnp.int32), axis=1)            # [N] int32 (exact correction)
    csum = jnp.pad(csum, (0, Np - N)).reshape(1, Np)

    b = jnp.asarray(bias, jnp.float32) / jnp.float32(out_scale)
    b = jnp.pad(b, (0, Np - N)).reshape(1, Np)

    return QLinearParams(wt=wt, csum=csum, bias=b, K=K, N=N)


# --------------------------------------------------------------------------------------
# Kernels
# --------------------------------------------------------------------------------------
def _shift_to_int8(x_u8):
    # quint8 zero-shift without widening: int8(x - 128) == bitcast(x XOR 0x80, int8).
    return pltpu.bitcast(x_u8 ^ jnp.uint8(0x80), jnp.int8)


def _requantize(corrected_f32, bias_ref, *, requant_mult, out_zp):
    y = corrected_f32 * jnp.float32(requant_mult) + bias_ref[...]
    y = jnp.round(y) + jnp.float32(out_zp)
    return jnp.clip(y, 0.0, 255.0).astype(jnp.uint8)


def _qlinear_kernel_nk1(x_ref, wt_ref, csum_ref, bias_ref, o_ref, *,
                        requant_mult, zp_eff, out_zp, use_int8_mxu):
    """Whole-K-resident variant: one dot, direct store, no accumulator scratch."""
    x8 = _shift_to_int8(x_ref[...])
    if use_int8_mxu:
        acc = jnp.dot(x8, wt_ref[...], preferred_element_type=jnp.int32)
        # Exact int32 zero-point correction (no f32 rounding before correction).
        corrected = (acc - jnp.int32(zp_eff) * csum_ref[...]).astype(jnp.float32)
    else:
        # Single cast per operand; int8/uint8-range values are exact in bf16, products
        # exact, f32 accumulation.
        # TODO(synk): f32 accumulation loses integer exactness for |acc| > 2^24
        # (in_features ≳ 1000 worst case) on chips without an integer MXU.
        acc = jnp.dot(x8.astype(jnp.bfloat16), wt_ref[...].astype(jnp.bfloat16),
                      preferred_element_type=jnp.float32)
        corrected = acc - jnp.float32(zp_eff) * csum_ref[...].astype(jnp.float32)
    o_ref[...] = _requantize(corrected, bias_ref, requant_mult=requant_mult, out_zp=out_zp)


def _qlinear_kernel_kacc(x_ref, wt_ref, csum_ref, bias_ref, o_ref, acc_ref, *,
                         n_k, requant_mult, zp_eff, out_zp, use_int8_mxu):
    """K-tiled variant with an output-resident accumulator scratch."""
    k = pl.program_id(2)
    x8 = _shift_to_int8(x_ref[...])
    if use_int8_mxu:
        part = jnp.dot(x8, wt_ref[...], preferred_element_type=jnp.int32)
    else:
        part = jnp.dot(x8.astype(jnp.bfloat16), wt_ref[...].astype(jnp.bfloat16),
                       preferred_element_type=jnp.float32)

    @pl.when(k == 0)
    def _first():
        acc_ref[...] = part          # write first partial directly (no zero-fill + add)

    @pl.when(k > 0)
    def _accum():
        acc_ref[...] += part

    @pl.when(k == n_k - 1)
    def _finalize():
        if use_int8_mxu:
            corrected = (acc_ref[...] - jnp.int32(zp_eff) * csum_ref[...]
                         ).astype(jnp.float32)
        else:
            corrected = acc_ref[...] - jnp.float32(zp_eff) * csum_ref[...].astype(jnp.float32)
        o_ref[...] = _requantize(corrected, bias_ref,
                                 requant_mult=requant_mult, out_zp=out_zp)


# --------------------------------------------------------------------------------------
# Forward wrapper
# --------------------------------------------------------------------------------------
def quantized_linear(x_q, x_scale, x_zp, params: QLinearParams, *,
                     w_scale=1.0, out_scale=1.0, out_zp=0, use_int8_mxu=None):
    """x_q: [B, K] uint8 activations; params: output of prepare_qlinear_params."""
    B, K = x_q.shape
    assert K == params.K, f"in_features mismatch: {K} vs {params.K}"
    if use_int8_mxu is None:
        use_int8_mxu = _use_int8_mxu_default()
    use_int8_mxu = bool(use_int8_mxu)

    Kp, Np = params.wt.shape
    vmem_limit = _vmem_limit_bytes()

    # ---- tile selection -----------------------------------------------------------
    Bp = _round_up(B, 32)                                  # 8-bit native sublane pack
    tm = _largest_div_tile(Bp, 32, 512)

    tn = _largest_div_tile(Np, 128, 512)
    # v7x: make sure the parallel (M x N) grid has >= 2 blocks so both TCs are used.
    if _tensorcores_per_chip() >= 2 and (Bp // tm) * (Np // tn) < 2 and tn > 128:
        tn = _largest_div_tile(Np, 128, tn // 2)

    w_bufs = 3 if tm <= 64 else 2
    acc_bytes = tm * tn * 4
    # Collapse the K axis when the K-resident operand buffers fit a modest VMEM budget.
    nk1_bytes = 2 * tm * Kp + w_bufs * Kp * tn + 2 * tm * tn + 8 * Np + acc_bytes
    if nk1_bytes <= min(vmem_limit // 2, 24 << 20):
        tk = Kp
    else:
        tk = _largest_div_tile(Kp, 128, 1024)
    n_k = Kp // tk

    grid_m, grid_n = Bp // tm, Np // tn
    total_steps = grid_m * grid_n * n_k
    # Deepen pipelining on the weight stream when per-tile compute is thin.
    use_buffered_w = (tm <= 64) and (total_steps >= 4)

    # ---- pad activations (only to 32 / 128 boundaries; padded cols hit zero W rows) --
    x_p = jnp.pad(x_q, ((0, Bp - B), (0, Kp - K)))

    requant_mult = float(x_scale) * float(w_scale) / float(out_scale)
    zp_eff = int(x_zp) - 128

    if n_k == 1:
        kernel = functools.partial(
            _qlinear_kernel_nk1,
            requant_mult=requant_mult, zp_eff=zp_eff, out_zp=int(out_zp),
            use_int8_mxu=use_int8_mxu)
        if use_buffered_w:
            w_spec = pl.BlockSpec((Kp, tn), lambda i, j: (0, j),
                                  pipeline_mode=pl.Buffered(3))
        else:
            w_spec = pl.BlockSpec((Kp, tn), lambda i, j: (0, j))
        out_p = pl.pallas_call(
            kernel,
            out_shape=jax.ShapeDtypeStruct((Bp, Np), jnp.uint8),
            grid=(grid_m, grid_n),
            in_specs=[
                pl.BlockSpec((tm, Kp), lambda i, j: (i, 0)),   # x tile (full K)
                w_spec,                                        # W^T tile (full K)
                pl.BlockSpec((1, tn), lambda i, j: (0, j)),    # colsum(W)
                pl.BlockSpec((1, tn), lambda i, j: (0, j)),    # bias / out_scale
            ],
            out_specs=pl.BlockSpec((tm, tn), lambda i, j: (i, j)),
            compiler_params=pltpu.CompilerParams(
                dimension_semantics=("parallel", "parallel"),
                vmem_limit_bytes=vmem_limit),
        )(x_p, params.wt, params.csum, params.bias)
    else:
        kernel = functools.partial(
            _qlinear_kernel_kacc,
            n_k=n_k, requant_mult=requant_mult, zp_eff=zp_eff, out_zp=int(out_zp),
            use_int8_mxu=use_int8_mxu)
        acc_dtype = jnp.int32 if use_int8_mxu else jnp.float32
        if use_buffered_w:
            w_spec = pl.BlockSpec((tk, tn), lambda i, j, k: (k, j),
                                  pipeline_mode=pl.Buffered(3))
        else:
            w_spec = pl.BlockSpec((tk, tn), lambda i, j, k: (k, j))
        out_p = pl.pallas_call(
            kernel,
            out_shape=jax.ShapeDtypeStruct((Bp, Np), jnp.uint8),
            grid=(grid_m, grid_n, n_k),
            in_specs=[
                pl.BlockSpec((tm, tk), lambda i, j, k: (i, k)),   # x tile
                w_spec,                                           # W^T tile
                pl.BlockSpec((1, tn), lambda i, j, k: (0, j)),    # colsum(W)
                pl.BlockSpec((1, tn), lambda i, j, k: (0, j)),    # bias / out_scale
            ],
            out_specs=pl.BlockSpec((tm, tn), lambda i, j, k: (i, j)),
            scratch_shapes=[pltpu.VMEM((tm, tn), acc_dtype)],
            compiler_params=pltpu.CompilerParams(
                dimension_semantics=("parallel", "parallel", "arbitrary"),
                vmem_limit_bytes=vmem_limit),
        )(x_p, params.wt, params.csum, params.bias)

    return out_p[:B, :params.N]


# --------------------------------------------------------------------------------------
# Self-test
# --------------------------------------------------------------------------------------
if __name__ == "__main__":
    # Linear(in_features=768, out_features=192), batch 16.  Exercises the
    # no-K-padding path (Kp=768), N padding to the 128-lane boundary (Np=256),
    # and the quint8 zero-point correction.
    B, K, N = 16, 768, 192

    key = jax.random.PRNGKey(0)
    kx, kw = jax.random.split(key)

    # Quantized input (quint8): uint8 values with an affine (scale, zero_point).
    x_scale, x_zp = 0.05, 100
    x_q = jax.random.randint(kx, (B, K), 0, 256, dtype=jnp.int32).astype(jnp.uint8)

    # Module config: weight qint8 (scale=1.0, zp=0), bias = zeros, out_scale=1.0, out_zp=0.
    w_scale, out_scale, out_zp = 1.0, 1.0, 0
    w_q = jax.random.randint(kw, (N, K), -128, 128, dtype=jnp.int32).astype(jnp.int8)
    bias = jnp.zeros((N,), dtype=jnp.float32)

    params = prepare_qlinear_params(w_q, bias, out_scale=out_scale)

    try:
        out = quantized_linear(x_q, x_scale, x_zp, params,
                               w_scale=w_scale, out_scale=out_scale, out_zp=out_zp)
        out = jax.block_until_ready(out)
    except Exception:
        # Portable fallback: bf16-operand / f32-accumulation path lowers on every TPU gen.
        out = quantized_linear(x_q, x_scale, x_zp, params,
                               w_scale=w_scale, out_scale=out_scale, out_zp=out_zp,
                               use_int8_mxu=False)
        out = jax.block_until_ready(out)

    # Pure-JAX reference of the quantized-linear semantics.
    ref_fp = ((x_q.astype(jnp.int32) - x_zp) @ w_q.astype(jnp.int32).T
              ).astype(jnp.float32) * (x_scale * w_scale) + bias
    ref = jnp.clip(jnp.round(ref_fp / out_scale) + out_zp, 0, 255).astype(jnp.uint8)

    assert out.shape == (B, N) and out.dtype == jnp.uint8
    # Constant folding of the requant scale can in principle move a value across a
    # round-to-nearest boundary; allow at most 1 LSB of requantization difference.
    max_diff = int(jnp.max(jnp.abs(out.astype(jnp.int32) - ref.astype(jnp.int32))))
    assert max_diff <= 1, f"max requant diff {max_diff} > 1"
    print("KERNEL_OK")
</pallas_src>

<mosaic_0001>
module attributes {stable_mosaic.version = 11 : i64} {
  func.func @_qlinear_kernel_nk1(%arg0: i32, %arg1: i32, %arg2: memref<32x768xi8, #tpu.memory_space<vmem>>, %arg3: memref<768x256xi8, #tpu.memory_space<vmem>>, %arg4: memref<1x256xi32, #tpu.memory_space<vmem>>, %arg5: memref<1x256xf32, #tpu.memory_space<vmem>>, %arg6: memref<32x256xi8, #tpu.memory_space<vmem>>) attributes {dimension_semantics = [#tpu.dimension_semantics<parallel>, #tpu.dimension_semantics<parallel>], iteration_bounds = array<i64: 1, 1>, scalar_prefetch = 0 : i64, scratch_operands = 0 : i64, tpu.core_type = #tpu.core_type<tc>, window_params = [{transform_indices = @transform_0, window_bounds = array<i64: 32, 768>}, {transform_indices = @transform_1, window_bounds = array<i64: 768, 256>}, {transform_indices = @transform_2, window_bounds = array<i64: 1, 256>}, {transform_indices = @transform_3, window_bounds = array<i64: 1, 256>}, {transform_indices = @transform_4, window_bounds = array<i64: 32, 256>}]} {
    %c0 = arith.constant 0 : index
    %c0_0 = arith.constant 0 : index
    %0 = vector.load %arg2[%c0, %c0_0] : memref<32x768xi8, #tpu.memory_space<vmem>>, vector<32x768xi8>
    %c-128_i8 = arith.constant -128 : i8
    %1 = vector.broadcast %c-128_i8 : i8 to vector<32x768xi8>
    %2 = arith.xori %0, %1 : vector<32x768xi8>
    %3 = tpu.bitcast %2 : vector<32x768xi8> -> vector<32x768xi8>
    %4 = arith.sitofp %3 : vector<32x768xi8> to vector<32x768xbf16>
    %c0_1 = arith.constant 0 : index
    %c0_2 = arith.constant 0 : index
    %5 = vector.load %arg3[%c0_1, %c0_2] : memref<768x256xi8, #tpu.memory_space<vmem>>, vector<768x256xi8>
    %6 = arith.sitofp %5 : vector<768x256xi8> to vector<768x256xbf16>
    %cst = arith.constant dense<0.000000e+00> : vector<32x256xf32>
    %7 = tpu.matmul %4, %6, %cst {dimension_numbers = #tpu.dot_dimension_numbers<[1], [0], [0], [1], [0, 0, 1, 1], [], []>} : vector<32x768xbf16>, vector<768x256xbf16>, vector<32x256xf32> -> vector<32x256xf32>
    %c0_3 = arith.constant 0 : index
    %c0_4 = arith.constant 0 : index
    %8 = vector.load %arg4[%c0_3, %c0_4] : memref<1x256xi32, #tpu.memory_space<vmem>>, vector<1x256xi32>
    %9 = arith.sitofp %8 : vector<1x256xi32> to vector<1x256xf32>
    %cst_5 = arith.constant -2.800000e+01 : f32
    %10 = vector.broadcast %cst_5 : f32 to vector<1x256xf32>
    %11 = arith.mulf %10, %9 : vector<1x256xf32>
    %12 = vector.broadcast %11 : vector<1x256xf32> to vector<32x256xf32>
    %13 = arith.subf %7, %12 : vector<32x256xf32>
    %cst_6 = arith.constant 5.000000e-02 : f32
    %14 = vector.broadcast %cst_6 : f32 to vector<32x256xf32>
    %15 = arith.mulf %13, %14 : vector<32x256xf32>
    %c0_7 = arith.constant 0 : index
    %c0_8 = arith.constant 0 : index
    %16 = vector.load %arg5[%c0_7, %c0_8] : memref<1x256xf32, #tpu.memory_space<vmem>>, vector<1x256xf32>
    %17 = vector.broadcast %16 : vector<1x256xf32> to vector<32x256xf32>
    %18 = arith.addf %15, %17 : vector<32x256xf32>
    %19 = math.roundeven %18 : vector<32x256xf32>
    %cst_9 = arith.constant 0.000000e+00 : f32
    %20 = vector.broadcast %cst_9 : f32 to vector<32x256xf32>
    %21 = arith.addf %19, %20 : vector<32x256xf32>
    %cst_10 = arith.constant 0.000000e+00 : f32
    %cst_11 = arith.constant 2.550000e+02 : f32
    %22 = vector.broadcast %cst_10 : f32 to vector<32x256xf32>
    %23 = arith.maximumf %22, %21 : vector<32x256xf32>
    %24 = vector.broadcast %cst_11 : f32 to vector<32x256xf32>
    %25 = arith.minimumf %24, %23 : vector<32x256xf32>
    %26 = arith.fptoui %25 : vector<32x256xf32> to vector<32x256xi8>
    %c0_12 = arith.constant 0 : index
    %c0_13 = arith.constant 0 : index
    %27 = vector.load %arg6[%c0_12, %c0_13] : memref<32x256xi8, #tpu.memory_space<vmem>>, vector<32x256xi8>
    tpu.vector_store %arg6[%c0_12, %c0_13], %26 {strides = array<i32>} : memref<32x256xi8, #tpu.memory_space<vmem>>, vector<32x256xi8>,
    return
  }
  func.func @transform_0(%arg0: i32, %arg1: i32) -> (i32, i32) {
    %c0_i32 = arith.constant 0 : i32
    %c0_i32_0 = arith.constant 0 : i32
    return %arg0, %c0_i32 : i32, i32
  }
  func.func @transform_1(%arg0: i32, %arg1: i32) -> (i32, i32) {
    %c0_i32 = arith.constant 0 : i32
    %c0_i32_0 = arith.constant 0 : i32
    return %c0_i32, %arg1 : i32, i32
  }
  func.func @transform_2(%arg0: i32, %arg1: i32) -> (i32, i32) {
    %c0_i32 = arith.constant 0 : i32
    %c0_i32_0 = arith.constant 0 : i32
    return %c0_i32, %arg1 : i32, i32
  }
  func.func @transform_3(%arg0: i32, %arg1: i32) -> (i32, i32) {
    %c0_i32 = arith.constant 0 : i32
    %c0_i32_0 = arith.constant 0 : i32
    return %c0_i32, %arg1 : i32, i32
  }
  func.func @transform_4(%arg0: i32, %arg1: i32) -> (i32, i32) {
    %c0_i32 = arith.constant 0 : i32
    return %arg0, %arg1 : i32, i32
  }
}

module attributes {stable_mosaic.version = 11 : i64} {
  func.func @_qlinear_kernel_nk1(%arg0: i32, %arg1: i32, %arg2: memref<32x768xi8, #tpu.memory_space<vmem>>, %arg3: memref<768x256xi8, #tpu.memory_space<vmem>>, %arg4: memref<1x256xi32, #tpu.memory_space<vmem>>, %arg5: memref<1x256xf32, #tpu.memory_space<vmem>>, %arg6: memref<32x256xi8, #tpu.memory_space<vmem>>) attributes {dimension_semantics = [#tpu.dimension_semantics<parallel>, #tpu.dimension_semantics<parallel>], iteration_bounds = array<i64: 1, 1>, scalar_prefetch = 0 : i64, scratch_operands = 0 : i64, tpu.core_type = #tpu.core_type<tc>, window_params = [{transform_indices = @transform_0, window_bounds = array<i64: 32, 768>}, {transform_indices = @transform_1, window_bounds = array<i64: 768, 256>}, {transform_indices = @transform_2, window_bounds = array<i64: 1, 256>}, {transform_indices = @transform_3, window_bounds = array<i64: 1, 256>}, {transform_indices = @transform_4, window_bounds = array<i64: 32, 256>}]} {
    %c0 = arith.constant 0 : index
    %c0_0 = arith.constant 0 : index
    %0 = vector.load %arg2[%c0, %c0_0] : memref<32x768xi8, #tpu.memory_space<vmem>>, vector<32x768xi8>
    %c-128_i8 = arith.constant -128 : i8
    %1 = vector.broadcast %c-128_i8 : i8 to vector<32x768xi8>
    %2 = arith.xori %0, %1 : vector<32x768xi8>
    %3 = tpu.bitcast %2 : vector<32x768xi8> -> vector<32x768xi8>
    %4 = arith.sitofp %3 : vector<32x768xi8> to vector<32x768xbf16>
    %c0_1 = arith.constant 0 : index
    %c0_2 = arith.constant 0 : index
    %5 = vector.load %arg3[%c0_1, %c0_2] : memref<768x256xi8, #tpu.memory_space<vmem>>, vector<768x256xi8>
    %6 = arith.sitofp %5 : vector<768x256xi8> to vector<768x256xbf16>
    %cst = arith.constant dense<0.000000e+00> : vector<32x256xf32>
    %7 = tpu.matmul %4, %6, %cst {dimension_numbers = #tpu.dot_dimension_numbers<[1], [0], [0], [1], [0, 0, 1, 1], [], []>} : vector<32x768xbf16>, vector<768x256xbf16>, vector<32x256xf32> -> vector<32x256xf32>
    %c0_3 = arith.constant 0 : index
    %c0_4 = arith.constant 0 : index
    %8 = vector.load %arg4[%c0_3, %c0_4] : memref<1x256xi32, #tpu.memory_space<vmem>>, vector<1x256xi32>
    %9 = arith.sitofp %8 : vector<1x256xi32> to vector<1x256xf32>
    %cst_5 = arith.constant -2.800000e+01 : f32
    %10 = vector.broadcast %cst_5 : f32 to vector<1x256xf32>
    %11 = arith.mulf %10, %9 : vector<1x256xf32>
    %12 = vector.broadcast %11 : vector<1x256xf32> to vector<32x256xf32>
    %13 = arith.subf %7, %12 : vector<32x256xf32>
    %cst_6 = arith.constant 5.000000e-02 : f32
    %14 = vector.broadcast %cst_6 : f32 to vector<32x256xf32>
    %15 = arith.mulf %13, %14 : vector<32x256xf32>
    %c0_7 = arith.constant 0 : index
    %c0_8 = arith.constant 0 : index
    %16 = vector.load %arg5[%c0_7, %c0_8] : memref<1x256xf32, #tpu.memory_space<vmem>>, vector<1x256xf32>
    %17 = vector.broadcast %16 : vector<1x256xf32> to vector<32x256xf32>
    %18 = arith.addf %15, %17 : vector<32x256xf32>
    %19 = math.roundeven %18 : vector<32x256xf32>
    %cst_9 = arith.constant 0.000000e+00 : f32
    %20 = vector.broadcast %cst_9 : f32 to vector<32x256xf32>
    %21 = arith.addf %19, %20 : vector<32x256xf32>
    %cst_10 = arith.constant 0.000000e+00 : f32
    %cst_11 = arith.constant 2.550000e+02 : f32
    %22 = vector.broadcast %cst_10 : f32 to vector<32x256xf32>
    %23 = arith.maximumf %22, %21 : vector<32x256xf32>
    %24 = vector.broadcast %cst_11 : f32 to vector<32x256xf32>
    %25 = arith.minimumf %24, %23 : vector<32x256xf32>
    %26 = arith.fptoui %25 : vector<32x256xf32> to vector<32x256xi8>
    %c0_12 = arith.constant 0 : index
    %c0_13 = arith.constant 0 : index
    %27 = vector.load %arg6[%c0_12, %c0_13] : memref<32x256xi8, #tpu.memory_space<vmem>>, vector<32x256xi8>
    tpu.vector_store %arg6[%c0_12, %c0_13], %26 {strides = array<i32>} : memref<32x256xi8, #tpu.memory_space<vmem>>, vector<32x256xi8>,
    return
  }
  func.func @transform_0(%arg0: i32, %arg1: i32) -> (i32, i32) {
    %c0_i32 = arith.constant 0 : i32
    %c0_i32_0 = arith.constant 0 : i32
    return %arg0, %c0_i32 : i32, i32
  }
  func.func @transform_1(%arg0: i32, %arg1: i32) -> (i32, i32) {
    %c0_i32 = arith.constant 0 : i32
    %c0_i32_0 = arith.constant 0 : i32
    return %c0_i32, %arg1 : i32, i32
  }
  func.func @transform_2(%arg0: i32, %arg1: i32) -> (i32, i32) {
    %c0_i32 = arith.constant 0 : i32
    %c0_i32_0 = arith.constant 0 : i32
    return %c0_i32, %arg1 : i32, i32
  }
  func.func @transform_3(%arg0: i32, %arg1: i32) -> (i32, i32) {
    %c0_i32 = arith.constant 0 : i32
    %c0_i32_0 = arith.constant 0 : i32
    return %c0_i32, %arg1 : i32, i32
  }
  func.func @transform_4(%arg0: i32, %arg1: i32) -> (i32, i32) {
    %c0_i32 = arith.constant 0 : i32
    return %arg0, %arg1 : i32, i32
  }
}

</mosaic_0001>

<llo_original>
// kernel: tpu_custom_call.1
$region0: #{tpu_custom_call.1}
  #allocation0 [shape = 'u32[]', space=smem, size = 0x4, offset = 0x4, fixed_abs, tag = 'smem constant byte address 0x4 - core index']
  #allocation1 [shape = 'u32[144,128]{1,0:T(1,128)}', space=vmem, size = 0x12000, scoped, tag = 'internal scratch']
  %s0 = inlined_call_operand.hbm [shape: u8[32,768], index: 0, kind: input, shape index: {}]
  %s1 = inlined_call_operand.hbm [shape: s8[768,256], index: 1, kind: input, shape index: {}]
  %s2 = inlined_call_operand.vmem [shape: s32[1,256], index: 2, kind: input, shape index: {}]
  %s3 = inlined_call_operand.vmem [shape: f32[1,256], index: 3, kind: input, shape index: {}]
  %s4 = inlined_call_operand.hbm [shape: u8[32,256], index: 4, kind: output, shape index: {}]
  %s5 = sld [smem:[#allocation0]]
  $region34: #{tpu_custom_call.1} parent=0
    _
  %s7 = ssub.s32 1, %s5
  %s8 = scalar_select 0, %s7, %s5
  $region1: #{tpu_custom_call.1} parent=0
    #allocation2 [shape = 'u8[24576]{0}', space=vmem, size = 0x6000, scoped, tag = 'input window, operand 0, single buffered']
    #allocation3 [shape = 's32[1]{0}', space=sflag, size = 0x4, scoped, tag = 'scoped memory for tpu_custom_call.1']
    #allocation4 [shape = 's32[1]{0}', space=sflag, size = 0x4, scoped, tag = 'scoped memory for tpu_custom_call.1']
    #allocation5 [shape = 'u8[196608]{0}', space=vmem, size = 0x30000, scoped, tag = 'input window, operand 1, single buffered']
    #allocation6 [shape = 's32[1]{0}', space=sflag, size = 0x4, scoped, tag = 'scoped memory for tpu_custom_call.1']
    #allocation7 [shape = 'u8[8192]{0}', space=vmem, size = 0x2000, scoped, tag = 'output window, operand 0, single buffered']
    %9 = vsyncpa [#allocation3], 0
    %10 = vsyncpa [#allocation6], 0
    %11 = vsyncpa [#allocation4], 0
    // Predicated region
    $region2: #{tpu_custom_call.1} parent=1 // pred_check
      _
    $region3: #{tpu_custom_call.1} parent=1 // pred_check_branch
      %13 = sbr.rel (0) target = $region5
    $region4: #{tpu_custom_call.1} parent=1 // pred_region
      %s15 = ssub.s32 768, 768
      %16 = vsyncadd [#allocation3], %s15
      %s18 = sshll.u32 [#allocation2], 4
      %s19 = int_to_ptr.vmem [resolvable:$true] %s18
      %21 = dma.hbm_to_vmem [thread:$0]  %s0, 768, %s19, [#allocation3]
    $region5: #{tpu_custom_call.1} parent=1 // pred_fallthru
      _
    // Predicated region
    $region6: #{tpu_custom_call.1} parent=1 // pred_check
      _
    $region7: #{tpu_custom_call.1} parent=1 // pred_check_branch
      %23 = sbr.rel (0) target = $region9
    $region8: #{tpu_custom_call.1} parent=1 // pred_region
      %s25 = ssub.s32 6144, 6144
      %26 = vsyncadd [#allocation6], %s25
      %s27 = sshll.u32 [#allocation5], 4
      %s28 = int_to_ptr.vmem [resolvable:$true] %s27
      %33 = dma.hbm_to_vmem [thread:$0]  %s1, 6144, %s28, [#allocation6], 256, 256, 16
    $region9: #{tpu_custom_call.1} parent=1 // pred_fallthru
      _
    // Predicated region
    $region10: #{tpu_custom_call.1} parent=1 // pred_check
      _
    $region11: #{tpu_custom_call.1} parent=1 // pred_check_branch
      %35 = sbr.rel (0) target = $region13
    $region12: #{tpu_custom_call.1} parent=1 // pred_region
      _
    $region13: #{tpu_custom_call.1} parent=1 // pred_fallthru
      _
    // Predicated region
    $region14: #{tpu_custom_call.1} parent=1 // pred_check
      _
    $region15: #{tpu_custom_call.1} parent=1 // pred_check_branch
      %37 = sbr.rel (0) target = $region17
    $region16: #{tpu_custom_call.1} parent=1 // pred_region
      _
    $region17: #{tpu_custom_call.1} parent=1 // pred_fallthru
      _
    // Predicated region
    $region18: #{tpu_custom_call.1} parent=1 // pred_check
      _
    $region19: #{tpu_custom_call.1} parent=1 // pred_check_branch
      %39 = sbr.rel (0) target = $region21
    $region20: #{tpu_custom_call.1} parent=1 // pred_region
      %40 = dma.done [#allocation3], 768
    $region21: #{tpu_custom_call.1} parent=1 // pred_fallthru
      _
    // Predicated region
    $region22: #{tpu_custom_call.1} parent=1 // pred_check
      _
    $region23: #{tpu_custom_call.1} parent=1 // pred_check_branch
      %42 = sbr.rel (0) target = $region25
    $region24: #{tpu_custom_call.1} parent=1 // pred_region
      %43 = dma.done [#allocation6], 6144
    $region25: #{tpu_custom_call.1} parent=1 // pred_fallthru
      _
    %v45 = vld [vmem:[#allocation2] sm:$0xff]
    %v46 = vld [vmem:[#allocation2 + $0x8] sm:$0xff]
    %v47 = vld [vmem:[#allocation2 + $0x10] sm:$0xff]
    %v48 = vld [vmem:[#allocation2 + $0x18] sm:$0xff]
    %v49 = vld [vmem:[#allocation2 + $0x20] sm:$0xff]
    %v50 = vld [vmem:[#allocation2 + $0x28] sm:$0xff]
    %v51 = vxor.u32 %v45, 2155905152
    %v52 = vxor.u32 %v46, 2155905152
    %v53 = vxor.u32 %v47, 2155905152
    %v54 = vxor.u32 %v48, 2155905152
    %v55 = vxor.u32 %v49, 2155905152
    %v56 = vxor.u32 %v50, 2155905152
    %v57 = vunpack.c.l.s8.bf16 %v51
    %v58 = vunpack.c.l.s8.bf16 %v52
    %v59 = vunpack.c.l.s8.bf16 %v53
    %v60 = vunpack.c.l.s8.bf16 %v54
    %v61 = vunpack.c.l.s8.bf16 %v55
    %v62 = vunpack.c.l.s8.bf16 %v56
    %v63 = vunpack.c.h.s8.bf16 %v51
    %v64 = vunpack.c.h.s8.bf16 %v52
    %v65 = vunpack.c.h.s8.bf16 %v53
    %v66 = vunpack.c.h.s8.bf16 %v54
    %v67 = vunpack.c.h.s8.bf16 %v55
    %v68 = vunpack.c.h.s8.bf16 %v56
    %v69 = vld [vmem:[#allocation5] sm:$0xff]
    %v70 = vld [vmem:[#allocation5 + $0x8] sm:$0xff]
    %v71 = vld [vmem:[#allocation5 + $0x10] sm:$0xff]
    %v72 = vld [vmem:[#allocation5 + $0x18] sm:$0xff]
    %v73 = vld [vmem:[#allocation5 + $0x20] sm:$0xff]
    %v74 = vld [vmem:[#allocation5 + $0x28] sm:$0xff]
    %v75 = vld [vmem:[#allocation5 + $0x30] sm:$0xff]
    %v76 = vld [vmem:[#allocation5 + $0x38] sm:$0xff]
    %v77 = vld [vmem:[#allocation5 + $0x40] sm:$0xff]
    %v78 = vld [vmem:[#allocation5 + $0x48] sm:$0xff]
    %v79 = vld [vmem:[#allocation5 + $0x50] sm:$0xff]
    %v80 = vld [vmem:[#allocation5 + $0x58] sm:$0xff]
    %v81 = vld [vmem:[#allocation5 + $0x60] sm:$0xff]
    %v82 = vld [vmem:[#allocation5 + $0x68] sm:$0xff]
    %v83 = vld [vmem:[#allocation5 + $0x70] sm:$0xff]
    %v84 = vld [vmem:[#allocation5 + $0x78] sm:$0xff]
    %v85 = vld [vmem:[#allocation5 + $0x80] sm:$0xff]
    %v86 = vld [vmem:[#allocation5 + $0x88] sm:$0xff]
    %v87 = vld [vmem:[#allocation5 + $0x90] sm:$0xff]
    %v88 = vld [vmem:[#allocation5 + $0x98] sm:$0xff]
    %v89 = vld [vmem:[#allocation5 + $0xa0] sm:$0xff]
    %v90 = vld [vmem:[#allocation5 + $0xa8] sm:$0xff]
    %v91 = vld [vmem:[#allocation5 + $0xb0] sm:$0xff]
    %v92 = vld [vmem:[#allocation5 + $0xb8] sm:$0xff]
    %v93 = vld [vmem:[#allocation5 + $0xc0] sm:$0xff]
    %v94 = vld [vmem:[#allocation5 + $0xc8] sm:$0xff]
    %v95 = vld [vmem:[#allocation5 + $0xd0] sm:$0xff]
    %v96 = vld [vmem:[#allocation5 + $0xd8] sm:$0xff]
    %v97 = vld [vmem:[#allocation5 + $0xe0] sm:$0xff]
    %v98 = vld [vmem:[#allocation5 + $0xe8] sm:$0xff]
    %v99 = vld [vmem:[#allocation5 + $0xf0] sm:$0xff]
    %v100 = vld [vmem:[#allocation5 + $0xf8] sm:$0xff]
    %v101 = vld [vmem:[#allocation5 + $0x100] sm:$0xff]
    %v102 = vld [vmem:[#allocation5 + $0x108] sm:$0xff]
    %v103 = vld [vmem:[#allocation5 + $0x110] sm:$0xff]
    %v104 = vld [vmem:[#allocation5 + $0x118] sm:$0xff]
    %v105 = vld [vmem:[#allocation5 + $0x120] sm:$0xff]
    %v106 = vld [vmem:[#allocation5 + $0x128] sm:$0xff]
    %v107 = vld [vmem:[#allocation5 + $0x130] sm:$0xff]
    %v108 = vld [vmem:[#allocation5 + $0x138] sm:$0xff]
    %v109 = vld [vmem:[#allocation5 + $0x140] sm:$0xff]
    %v110 = vld [vmem:[#allocation5 + $0x148] sm:$0xff]
    %v111 = vld [vmem:[#allocation5 + $0x150] sm:$0xff]
    %v112 = vld [vmem:[#allocation5 + $0x158] sm:$0xff]
    %v113 = vld [vmem:[#allocation5 + $0x160] sm:$0xff]
    %v114 = vld [vmem:[#allocation5 + $0x168] sm:$0xff]
    %v115 = vld [vmem:[#allocation5 + $0x170] sm:$0xff]
    %v116 = vld [vmem:[#allocation5 + $0x178] sm:$0xff]
    %v117 = vunpack.c.l.s8.bf16 %v69
    %v118 = vunpack.c.l.s8.bf16 %v70
    %v119 = vunpack.c.h.s8.bf16 %v69
    %v120 = vunpack.c.h.s8.bf16 %v70
    %v121 = vunpack.c.l.s8.bf16 %v71
    %v122 = vunpack.c.l.s8.bf16 %v72
    %v123 = vunpack.c.h.s8.bf16 %v71
    %v124 = vunpack.c.h.s8.bf16 %v72
    %v125 = vunpack.c.l.s8.bf16 %v73
    %v126 = vunpack.c.l.s8.bf16 %v74
    %v127 = vunpack.c.h.s8.bf16 %v73
    %v128 = vunpack.c.h.s8.bf16 %v74
    %v129 = vunpack.c.l.s8.bf16 %v75
    %v130 = vunpack.c.l.s8.bf16 %v76
    %v131 = vunpack.c.h.s8.bf16 %v75
    %v132 = vunpack.c.h.s8.bf16 %v76
    %v133 = vunpack.c.l.s8.bf16 %v77
    %v134 = vunpack.c.l.s8.bf16 %v78
    %v135 = vunpack.c.h.s8.bf16 %v77
    %v136 = vunpack.c.h.s8.bf16 %v78
    %v137 = vunpack.c.l.s8.bf16 %v79
    %v138 = vunpack.c.l.s8.bf16 %v80
    %v139 = vunpack.c.h.s8.bf16 %v79
    %v140 = vunpack.c.h.s8.bf16 %v80
    %v141 = vunpack.c.l.s8.bf16 %v81
    %v142 = vunpack.c.l.s8.bf16 %v82
    %v143 = vunpack.c.h.s8.bf16 %v81
    %v144 = vunpack.c.h.s8.bf16 %v82
    %v145 = vunpack.c.l.s8.bf16 %v83
    %v146 = vunpack.c.l.s8.bf16 %v84
    %v147 = vunpack.c.h.s8.bf16 %v83
    %v148 = vunpack.c.h.s8.bf16 %v84
    %v149 = vunpack.c.l.s8.bf16 %v85
    %v150 = vunpack.c.l.s8.bf16 %v86
    %v151 = vunpack.c.h.s8.bf16 %v85
    %v152 = vunpack.c.h.s8.bf16 %v86
    %v153 = vunpack.c.l.s8.bf16 %v87
    %v154 = vunpack.c.l.s8.bf16 %v88
    %v155 = vunpack.c.h.s8.bf16 %v87
    %v156 = vunpack.c.h.s8.bf16 %v88
    %v157 = vunpack.c.l.s8.bf16 %v89
    %v158 = vunpack.c.l.s8.bf16 %v90
    %v159 = vunpack.c.h.s8.bf16 %v89
    %v160 = vunpack.c.h.s8.bf16 %v90
    %v161 = vunpack.c.l.s8.bf16 %v91
    %v162 = vunpack.c.l.s8.bf16 %v92
    %v163 = vunpack.c.h.s8.bf16 %v91
    %v164 = vunpack.c.h.s8.bf16 %v92
    %v165 = vunpack.c.l.s8.bf16 %v93
    %v166 = vunpack.c.l.s8.bf16 %v94
    %v167 = vunpack.c.h.s8.bf16 %v93
    %v168 = vunpack.c.h.s8.bf16 %v94
    %v169 = vunpack.c.l.s8.bf16 %v95
    %v170 = vunpack.c.l.s8.bf16 %v96
    %v171 = vunpack.c.h.s8.bf16 %v95
    %v172 = vunpack.c.h.s8.bf16 %v96
    %v173 = vunpack.c.l.s8.bf16 %v97
    %v174 = vunpack.c.l.s8.bf16 %v98
    %v175 = vunpack.c.h.s8.bf16 %v97
    %v176 = vunpack.c.h.s8.bf16 %v98
    %v177 = vunpack.c.l.s8.bf16 %v99
    %v178 = vunpack.c.l.s8.bf16 %v100
    %v179 = vunpack.c.h.s8.bf16 %v99
    %v180 = vunpack.c.h.s8.bf16 %v100
    %v181 = vunpack.c.l.s8.bf16 %v101
    %v182 = vunpack.c.l.s8.bf16 %v102
    %v183 = vunpack.c.h.s8.bf16 %v101
    %v184 = vunpack.c.h.s8.bf16 %v102
    %v185 = vunpack.c.l.s8.bf16 %v103
    %v186 = vunpack.c.l.s8.bf16 %v104
    %v187 = vunpack.c.h.s8.bf16 %v103
    %v188 = vunpack.c.h.s8.bf16 %v104
    %v189 = vunpack.c.l.s8.bf16 %v105
    %v190 = vunpack.c.l.s8.bf16 %v106
    %v191 = vunpack.c.h.s8.bf16 %v105
    %v192 = vunpack.c.h.s8.bf16 %v106
    %v193 = vunpack.c.l.s8.bf16 %v107
    %v194 = vunpack.c.l.s8.bf16 %v108
    %v195 = vunpack.c.h.s8.bf16 %v107
    %v196 = vunpack.c.h.s8.bf16 %v108
    %v197 = vunpack.c.l.s8.bf16 %v109
    %v198 = vunpack.c.l.s8.bf16 %v110
    %v199 = vunpack.c.h.s8.bf16 %v109
    %v200 = vunpack.c.h.s8.bf16 %v110
    %v201 = vunpack.c.l.s8.bf16 %v111
    %v202 = vunpack.c.l.s8.bf16 %v112
    %v203 = vunpack.c.h.s8.bf16 %v111
    %v204 = vunpack.c.h.s8.bf16 %v112
    %v205 = vunpack.c.l.s8.bf16 %v113
    %v206 = vunpack.c.l.s8.bf16 %v114
    %v207 = vunpack.c.h.s8.bf16 %v113
    %v208 = vunpack.c.h.s8.bf16 %v114
    %v209 = vunpack.c.l.s8.bf16 %v115
    %v210 = vunpack.c.l.s8.bf16 %v116
    %v211 = vunpack.c.h.s8.bf16 %v115
    %v212 = vunpack.c.h.s8.bf16 %v116
    %213 = vmatprep.subr.bf16.mxu0 %v118
    %214 = vmatpush1.bf16.msra.mxu0 %v117
    %215 = vmatprep.subr.bf16.mxu0 %v120
    %216 = vmatpush1.bf16.msra.mxu0 %v119
    %217 = vmatprep.subr.bf16.mxu0 %v122
    %218 = vmatpush1.bf16.msra.mxu0 %v121
    %219 = vmatprep.subr.bf16.mxu0 %v124
    %220 = vmatpush1.bf16.msra.mxu0 %v123
    %221 = vmatprep.subr.bf16.mxu0 %v126
    %222 = vmatpush1.bf16.msra.mxu0 %v125
    %223 = vmatprep.subr.bf16.mxu0 %v128
    %224 = vmatpush1.bf16.msra.mxu0 %v127
    %225 = vmatprep.subr.bf16.mxu0 %v130
    %226 = vmatpush1.bf16.msra.mxu0 %v129
    %227 = vmatprep.subr.bf16.mxu0 %v132
    %228 = vmatpush1.bf16.msra.mxu0 %v131
    %229 = vmatprep.subr.bf16.mxu0 %v134
    %230 = vmatpush1.bf16.msra.mxu0 %v133
    %231 = vmatprep.subr.bf16.mxu0 %v136
    %232 = vmatpush1.bf16.msra.mxu0 %v135
    %233 = vmatprep.subr.bf16.mxu0 %v138
    %234 = vmatpush1.bf16.msra.mxu0 %v137
    %235 = vmatprep.subr.bf16.mxu0 %v140
    %236 = vmatpush1.bf16.msra.mxu0 %v139
    %237 = vmatprep.subr.bf16.mxu0 %v142
    %238 = vmatpush1.bf16.msra.mxu0 %v141
    %239 = vmatprep.subr.bf16.mxu0 %v144
    %240 = vmatpush1.bf16.msra.mxu0 %v143
    %241 = vmatprep.subr.bf16.mxu0 %v146
    %242 = vmatpush1.bf16.msra.mxu0 %v145
    %243 = vmatprep.subr.bf16.mxu0 %v148
    %244 = vmatpush1.bf16.msra.mxu0 %v147
    %245 = vmatprep.mubr.bf16.mxu0 %v58
    %246 = vmatmul.mubr.bf16.gmra.mrb[0].mxu0 %v57
    %v247 = vpop.f32.mrb[0].mxu0
    %v248 = vadd.f32 0.0, %v247
    %v249 = vpop.f32.mrb[0].mxu0
    %v250 = vadd.f32 0.0, %v249
    %v251 = vpop.f32.mrb[0].mxu0
    %v252 = vadd.f32 0.0, %v251
    %v253 = vpop.f32.mrb[0].mxu0
    %v254 = vadd.f32 0.0, %v253
    %255 = vmatprep.mubr.bf16.mxu0 %v64
    %256 = vmatmul.mubr.bf16.gmra.mrb[0].mxu0 %v63
    %v257 = vpop.f32.mrb[0].mxu0
    %v258 = vadd.f32 0.0, %v257
    %v259 = vpop.f32.mrb[0].mxu0
    %v260 = vadd.f32 0.0, %v259
    %v261 = vpop.f32.mrb[0].mxu0
    %v262 = vadd.f32 0.0, %v261
    %v263 = vpop.f32.mrb[0].mxu0
    %v264 = vadd.f32 0.0, %v263
    %265 = vdwg.mxu0
    %266 = vmatprep.subr.bf16.mxu0 %v150
    %267 = vmatpush1.bf16.msra.mxu0 %v149
    %268 = vmatprep.subr.bf16.mxu0 %v152
    %269 = vmatpush1.bf16.msra.mxu0 %v151
    %270 = vmatprep.subr.bf16.mxu0 %v154
    %271 = vmatpush1.bf16.msra.mxu0 %v153
    %272 = vmatprep.subr.bf16.mxu0 %v156
    %273 = vmatpush1.bf16.msra.mxu0 %v155
    %274 = vmatprep.subr.bf16.mxu0 %v158
    %275 = vmatpush1.bf16.msra.mxu0 %v157
    %276 = vmatprep.subr.bf16.mxu0 %v160
    %277 = vmatpush1.bf16.msra.mxu0 %v159
    %278 = vmatprep.subr.bf16.mxu0 %v162
    %279 = vmatpush1.bf16.msra.mxu0 %v161
    %280 = vmatprep.subr.bf16.mxu0 %v164
    %281 = vmatpush1.bf16.msra.mxu0 %v163
    %282 = vmatprep.subr.bf16.mxu0 %v166
    %283 = vmatpush1.bf16.msra.mxu0 %v165
    %284 = vmatprep.subr.bf16.mxu0 %v168
    %285 = vmatpush1.bf16.msra.mxu0 %v167
    %286 = vmatprep.subr.bf16.mxu0 %v170
    %287 = vmatpush1.bf16.msra.mxu0 %v169
    %288 = vmatprep.subr.bf16.mxu0 %v172
    %289 = vmatpush1.bf16.msra.mxu0 %v171
    %290 = vmatprep.subr.bf16.mxu0 %v174
    %291 = vmatpush1.bf16.msra.mxu0 %v173
    %292 = vmatprep.subr.bf16.mxu0 %v176
    %293 = vmatpush1.bf16.msra.mxu0 %v175
    %294 = vmatprep.subr.bf16.mxu0 %v178
    %295 = vmatpush1.bf16.msra.mxu0 %v177
    %296 = vmatprep.subr.bf16.mxu0 %v180
    %297 = vmatpush1.bf16.msra.mxu0 %v179
    %298 = vmatprep.mubr.bf16.mxu0 %v60
    %299 = vmatmul.mubr.bf16.gmra.mrb[0].mxu0 %v59
    %v300 = vpop.f32.mrb[0].mxu0
    %v301 = vadd.f32 %v248, %v300
    %v302 = vpop.f32.mrb[0].mxu0
    %v303 = vadd.f32 %v250, %v302
    %v304 = vpop.f32.mrb[0].mxu0
    %v305 = vadd.f32 %v252, %v304
    %v306 = vpop.f32.mrb[0].mxu0
    %v307 = vadd.f32 %v254, %v306
    %308 = vmatprep.mubr.bf16.mxu0 %v66
    %309 = vmatmul.mubr.bf16.gmra.mrb[0].mxu0 %v65
    %v310 = vpop.f32.mrb[0].mxu0
    %v311 = vadd.f32 %v258, %v310
    %v312 = vpop.f32.mrb[0].mxu0
    %v313 = vadd.f32 %v260, %v312
    %v314 = vpop.f32.mrb[0].mxu0
    %v315 = vadd.f32 %v262, %v314
    %v316 = vpop.f32.mrb[0].mxu0
    %v317 = vadd.f32 %v264, %v316
    %318 = vdwg.mxu0
    %319 = vmatprep.subr.bf16.mxu0 %v182
    %320 = vmatpush1.bf16.msra.mxu0 %v181
    %321 = vmatprep.subr.bf16.mxu0 %v184
    %322 = vmatpush1.bf16.msra.mxu0 %v183
    %323 = vmatprep.subr.bf16.mxu0 %v186
    %324 = vmatpush1.bf16.msra.mxu0 %v185
    %325 = vmatprep.subr.bf16.mxu0 %v188
    %326 = vmatpush1.bf16.msra.mxu0 %v187
    %327 = vmatprep.subr.bf16.mxu0 %v190
    %328 = vmatpush1.bf16.msra.mxu0 %v189
    %329 = vmatprep.subr.bf16.mxu0 %v192
    %330 = vmatpush1.bf16.msra.mxu0 %v191
    %331 = vmatprep.subr.bf16.mxu0 %v194
    %332 = vmatpush1.bf16.msra.mxu0 %v193
    %333 = vmatprep.subr.bf16.mxu0 %v196
    %334 = vmatpush1.bf16.msra.mxu0 %v195
    %335 = vmatprep.subr.bf16.mxu0 %v198
    %336 = vmatpush1.bf16.msra.mxu0 %v197
    %337 = vmatprep.subr.bf16.mxu0 %v200
    %338 = vmatpush1.bf16.msra.mxu0 %v199
    %339 = vmatprep.subr.bf16.mxu0 %v202
    %340 = vmatpush1.bf16.msra.mxu0 %v201
    %341 = vmatprep.subr.bf16.mxu0 %v204
    %342 = vmatpush1.bf16.msra.mxu0 %v203
    %343 = vmatprep.subr.bf16.mxu0 %v206
    %344 = vmatpush1.bf16.msra.mxu0 %v205
    %345 = vmatprep.subr.bf16.mxu0 %v208
    %346 = vmatpush1.bf16.msra.mxu0 %v207
    %347 = vmatprep.subr.bf16.mxu0 %v210
    %348 = vmatpush1.bf16.msra.mxu0 %v209
    %349 = vmatprep.subr.bf16.mxu0 %v212
    %350 = vmatpush1.bf16.msra.mxu0 %v211
    %351 = vmatprep.mubr.bf16.mxu0 %v62
    %352 = vmatmul.mubr.bf16.gmra.mrb[0].mxu0 %v61
    %v353 = vpop.f32.mrb[0].mxu0
    %v354 = vadd.f32 %v301, %v353
    %v355 = vpop.f32.mrb[0].mxu0
    %v356 = vadd.f32 %v303, %v355
    %v357 = vpop.f32.mrb[0].mxu0
    %v358 = vadd.f32 %v305, %v357
    %v359 = vpop.f32.mrb[0].mxu0
    %v360 = vadd.f32 %v307, %v359
    %361 = vmatprep.mubr.bf16.mxu0 %v68
    %362 = vmatmul.mubr.bf16.gmra.mrb[0].mxu0 %v67
    %v363 = vpop.f32.mrb[0].mxu0
    %v364 = vadd.f32 %v311, %v363
    %v365 = vpop.f32.mrb[0].mxu0
    %v366 = vadd.f32 %v313, %v365
    %v367 = vpop.f32.mrb[0].mxu0
    %v368 = vadd.f32 %v315, %v367
    %v369 = vpop.f32.mrb[0].mxu0
    %v370 = vadd.f32 %v317, %v369
    %371 = vdwg.mxu0
    %v372 = vld [vmem:[%s2] sm:$0x3]
    %v373 = vcvt.s32.f32 %v372
    %v374 = vmul.f32 %v373, -28.0
    %v376 = vlaneseq
    %v377 = vshrl.u32 %v376, 7
    %v378 = vsub.s32 0, %v377
    %v379 = vrot.slane %v374, %v378
    %v380 = vlaneseq
    %v381 = vshrl.u32 %v380, 7
    %v382 = vsub.s32 1, %v381
    %v383 = vrot.slane %v374, %v382
    %v386 = vsub.f32 %v354, %v379
    %v387 = vsub.f32 %v356, %v383
    %v388 = vsub.f32 %v358, %v379
    %v389 = vsub.f32 %v360, %v383
    %v390 = vsub.f32 %v364, %v379
    %v391 = vsub.f32 %v366, %v383
    %v392 = vsub.f32 %v368, %v379
    %v393 = vsub.f32 %v370, %v383
    %v394 = vmul.f32 %v386, 0.05
    %v395 = vmul.f32 %v387, 0.05
    %v396 = vmul.f32 %v388, 0.05
    %v397 = vmul.f32 %v389, 0.05
    %v398 = vmul.f32 %v390, 0.05
    %v399 = vmul.f32 %v391, 0.05
    %v400 = vmul.f32 %v392, 0.05
    %v401 = vmul.f32 %v393, 0.05
    %v402 = vld [vmem:[%s3] sm:$0x3]
    %v404 = vlaneseq
    %v405 = vshrl.u32 %v404, 7
    %v406 = vsub.s32 0, %v405
    %v407 = vrot.slane %v402, %v406
    %v408 = vlaneseq
    %v409 = vshrl.u32 %v408, 7
    %v410 = vsub.s32 1, %v409
    %v411 = vrot.slane %v402, %v410
    %v414 = vadd.f32 %v394, %v407
    %v415 = vadd.f32 %v395, %v411
    %v416 = vadd.f32 %v396, %v407
    %v417 = vadd.f32 %v397, %v411
    %v418 = vadd.f32 %v398, %v407
    %v419 = vadd.f32 %v399, %v411
    %v420 = vadd.f32 %v400, %v407
    %v421 = vadd.f32 %v401, %v411
    %v422 = vround.ne.pseudo %v414
    %v423 = vround.ne.pseudo %v415
    %v424 = vround.ne.pseudo %v416
    %v425 = vround.ne.pseudo %v417
    %v426 = vround.ne.pseudo %v418
    %v427 = vround.ne.pseudo %v419
    %v428 = vround.ne.pseudo %v420
    %v429 = vround.ne.pseudo %v421
    %v430 = vadd.f32 %v422, 0.0
    %v431 = vadd.f32 %v423, 0.0
    %v432 = vadd.f32 %v424, 0.0
    %v433 = vadd.f32 %v425, 0.0
    %v434 = vadd.f32 %v426, 0.0
    %v435 = vadd.f32 %v427, 0.0
    %v436 = vadd.f32 %v428, 0.0
    %v437 = vadd.f32 %v429, 0.0
    %v438 = vmax.f32 %v430, 0.0
    %v439 = vmax.f32 %v431, 0.0
    %v440 = vmax.f32 %v432, 0.0
    %v441 = vmax.f32 %v433, 0.0
    %v442 = vmax.f32 %v434, 0.0
    %v443 = vmax.f32 %v435, 0.0
    %v444 = vmax.f32 %v436, 0.0
    %v445 = vmax.f32 %v437, 0.0
    %v446 = vmin.f32 %v438, 255.0
    %v447 = vmin.f32 %v439, 255.0
    %v448 = vmin.f32 %v440, 255.0
    %v449 = vmin.f32 %v441, 255.0
    %v450 = vmin.f32 %v442, 255.0
    %v451 = vmin.f32 %v443, 255.0
    %v452 = vmin.f32 %v444, 255.0
    %v453 = vmin.f32 %v445, 255.0
    %v454 = vtrunc.f32 %v446
    %v455 = vtrunc.f32 %v447
    %v456 = vtrunc.f32 %v448
    %v457 = vtrunc.f32 %v449
    %v458 = vtrunc.f32 %v450
    %v459 = vtrunc.f32 %v451
    %v460 = vtrunc.f32 %v452
    %v461 = vtrunc.f32 %v453
    %v462 = vpack.c.f32.eXmY %v454, %v456, 56
    %v466 = vpack.c.f32.eXmY %v458, %v460, 56
    %v470 = vpack.c.b8 %v466, %v462
    %v472 = vpack.c.f32.eXmY %v455, %v457, 56
    %v476 = vpack.c.f32.eXmY %v459, %v461, 56
    %v480 = vpack.c.b8 %v476, %v472
    %482 = vst [vmem:[#allocation7] sm:$0xff] %v470
    %483 = vst [vmem:[#allocation7 + $0x8] sm:$0xff] %v480
    // Predicated region
    $region26: #{tpu_custom_call.1} parent=1 // pred_check
      _
    $region27: #{tpu_custom_call.1} parent=1 // pred_check_branch
      %485 = sbr.rel (0) target = $region29
    $region28: #{tpu_custom_call.1} parent=1 // pred_region
      %s487 = ssub.s32 256, 256
      %488 = vsyncadd [#allocation4], %s487
      %s490 = sshll.u32 [#allocation7], 4
      %s491 = int_to_ptr.vmem [resolvable:$true] %s490
      %493 = dma.vmem_to_hbm [thread:$0]  %s491, 256, %s4, [#allocation4]
    $region29: #{tpu_custom_call.1} parent=1 // pred_fallthru
      _
    // Predicated region
    $region30: #{tpu_custom_call.1} parent=1 // pred_check
      _
    $region31: #{tpu_custom_call.1} parent=1 // pred_check_branch
      %495 = sbr.rel (0) target = $region33
    $region32: #{tpu_custom_call.1} parent=1 // pred_region
      %496 = dma.done [#allocation4], 256
    $region33: #{tpu_custom_call.1} parent=1 // pred_fallthru
      _
    %497 = vsyncpa [#allocation3], 1
    %498 = vsyncpa [#allocation6], 1
    %499 = vsyncpa [#allocation4], 1

// kernel: tpu_custom_call.1
$region0: #{tpu_custom_call.1}
  #allocation0 [shape = 'u32[]', space=smem, size = 0x4, offset = 0x4, fixed_abs, tag = 'smem constant byte address 0x4 - core index']
  #allocation1 [shape = 'u32[144,128]{1,0:T(1,128)}', space=vmem, size = 0x12000, scoped, tag = 'internal scratch']
  %s0 = inlined_call_operand.hbm [shape: u8[32,768], index: 0, kind: input, shape index: {}]
  %s1 = inlined_call_operand.hbm [shape: s8[768,256], index: 1, kind: input, shape index: {}]
  %s2 = inlined_call_operand.vmem [shape: s32[1,256], index: 2, kind: input, shape index: {}]
  %s3 = inlined_call_operand.vmem [shape: f32[1,256], index: 3, kind: input, shape index: {}]
  %s4 = inlined_call_operand.hbm [shape: u8[32,256], index: 4, kind: output, shape index: {}]
  %s5 = sld [smem:[#allocation0]]
  $region34: #{tpu_custom_call.1} parent=0
    _
  %s7 = ssub.s32 1, %s5
  %s8 = scalar_select 0, %s7, %s5
  $region1: #{tpu_custom_call.1} parent=0
    #allocation2 [shape = 'u8[24576]{0}', space=vmem, size = 0x6000, scoped, tag = 'input window, operand 0, single buffered']
    #allocation3 [shape = 's32[1]{0}', space=sflag, size = 0x4, scoped, tag = 'scoped memory for tpu_custom_call.1']
    #allocation4 [shape = 's32[1]{0}', space=sflag, size = 0x4, scoped, tag = 'scoped memory for tpu_custom_call.1']
    #allocation5 [shape = 'u8[196608]{0}', space=vmem, size = 0x30000, scoped, tag = 'input window, operand 1, single buffered']
    #allocation6 [shape = 's32[1]{0}', space=sflag, size = 0x4, scoped, tag = 'scoped memory for tpu_custom_call.1']
    #allocation7 [shape = 'u8[8192]{0}', space=vmem, size = 0x2000, scoped, tag = 'output window, operand 0, single buffered']
    %9 = vsyncpa [#allocation3], 0
    %10 = vsyncpa [#allocation6], 0
    %11 = vsyncpa [#allocation4], 0
    // Predicated region
    $region2: #{tpu_custom_call.1} parent=1 // pred_check
      _
    $region3: #{tpu_custom_call.1} parent=1 // pred_check_branch
      %13 = sbr.rel (0) target = $region5
    $region4: #{tpu_custom_call.1} parent=1 // pred_region
      %s15 = ssub.s32 768, 768
      %16 = vsyncadd [#allocation3], %s15
      %s18 = sshll.u32 [#allocation2], 4
      %s19 = int_to_ptr.vmem [resolvable:$true] %s18
      %21 = dma.hbm_to_vmem [thread:$0]  %s0, 768, %s19, [#allocation3]
    $region5: #{tpu_custom_call.1} parent=1 // pred_fallthru
      _
    // Predicated region
    $region6: #{tpu_custom_call.1} parent=1 // pred_check
      _
    $region7: #{tpu_custom_call.1} parent=1 // pred_check_branch
      %23 = sbr.rel (0) target = $region9
    $region8: #{tpu_custom_call.1} parent=1 // pred_region
      %s25 = ssub.s32 6144, 6144
      %26 = vsyncadd [#allocation6], %s25
      %s27 = sshll.u32 [#allocation5], 4
      %s28 = int_to_ptr.vmem [resolvable:$true] %s27
      %33 = dma.hbm_to_vmem [thread:$0]  %s1, 6144, %s28, [#allocation6], 256, 256, 16
    $region9: #{tpu_custom_call.1} parent=1 // pred_fallthru
      _
    // Predicated region
    $region10: #{tpu_custom_call.1} parent=1 // pred_check
      _
    $region11: #{tpu_custom_call.1} parent=1 // pred_check_branch
      %35 = sbr.rel (0) target = $region13
    $region12: #{tpu_custom_call.1} parent=1 // pred_region
      _
    $region13: #{tpu_custom_call.1} parent=1 // pred_fallthru
      _
    // Predicated region
    $region14: #{tpu_custom_call.1} parent=1 // pred_check
      _
    $region15: #{tpu_custom_call.1} parent=1 // pred_check_branch
      %37 = sbr.rel (0) target = $region17
    $region16: #{tpu_custom_call.1} parent=1 // pred_region
      _
    $region17: #{tpu_custom_call.1} parent=1 // pred_fallthru
      _
    // Predicated region
    $region18: #{tpu_custom_call.1} parent=1 // pred_check
      _
    $region19: #{tpu_custom_call.1} parent=1 // pred_check_branch
      %39 = sbr.rel (0) target = $region21
    $region20: #{tpu_custom_call.1} parent=1 // pred_region
      %40 = dma.done [#allocation3], 768
    $region21: #{tpu_custom_call.1} parent=1 // pred_fallthru
      _
    // Predicated region
    $region22: #{tpu_custom_call.1} parent=1 // pred_check
      _
    $region23: #{tpu_custom_call.1} parent=1 // pred_check_branch
      %42 = sbr.rel (0) target = $region25
    $region24: #{tpu_custom_call.1} parent=1 // pred_region
      %43 = dma.done [#allocation6], 6144
    $region25: #{tpu_custom_call.1} parent=1 // pred_fallthru
      _
    %v45 = vld [vmem:[#allocation2] sm:$0xff]
    %v46 = vld [vmem:[#allocation2 + $0x8] sm:$0xff]
    %v47 = vld [vmem:[#allocation2 + $0x10] sm:$0xff]
    %v48 = vld [vmem:[#allocation2 + $0x18] sm:$0xff]
    %v49 = vld [vmem:[#allocation2 + $0x20] sm:$0xff]
    %v50 = vld [vmem:[#allocation2 + $0x28] sm:$0xff]
    %v51 = vxor.u32 %v45, 2155905152
    %v52 = vxor.u32 %v46, 2155905152
    %v53 = vxor.u32 %v47, 2155905152
    %v54 = vxor.u32 %v48, 2155905152
    %v55 = vxor.u32 %v49, 2155905152
    %v56 = vxor.u32 %v50, 2155905152
    %v57 = vunpack.c.l.s8.bf16 %v51
    %v58 = vunpack.c.l.s8.bf16 %v52
    %v59 = vunpack.c.l.s8.bf16 %v53
    %v60 = vunpack.c.l.s8.bf16 %v54
    %v61 = vunpack.c.l.s8.bf16 %v55
    %v62 = vunpack.c.l.s8.bf16 %v56
    %v63 = vunpack.c.h.s8.bf16 %v51
    %v64 = vunpack.c.h.s8.bf16 %v52
    %v65 = vunpack.c.h.s8.bf16 %v53
    %v66 = vunpack.c.h.s8.bf16 %v54
    %v67 = vunpack.c.h.s8.bf16 %v55
    %v68 = vunpack.c.h.s8.bf16 %v56
    %v69 = vld [vmem:[#allocation5] sm:$0xff]
    %v70 = vld [vmem:[#allocation5 + $0x8] sm:$0xff]
    %v71 = vld [vmem:[#allocation5 + $0x10] sm:$0xff]
    %v72 = vld [vmem:[#allocation5 + $0x18] sm:$0xff]
    %v73 = vld [vmem:[#allocation5 + $0x20] sm:$0xff]
    %v74 = vld [vmem:[#allocation5 + $0x28] sm:$0xff]
    %v75 = vld [vmem:[#allocation5 + $0x30] sm:$0xff]
    %v76 = vld [vmem:[#allocation5 + $0x38] sm:$0xff]
    %v77 = vld [vmem:[#allocation5 + $0x40] sm:$0xff]
    %v78 = vld [vmem:[#allocation5 + $0x48] sm:$0xff]
    %v79 = vld [vmem:[#allocation5 + $0x50] sm:$0xff]
    %v80 = vld [vmem:[#allocation5 + $0x58] sm:$0xff]
    %v81 = vld [vmem:[#allocation5 + $0x60] sm:$0xff]
    %v82 = vld [vmem:[#allocation5 + $0x68] sm:$0xff]
    %v83 = vld [vmem:[#allocation5 + $0x70] sm:$0xff]
    %v84 = vld [vmem:[#allocation5 + $0x78] sm:$0xff]
    %v85 = vld [vmem:[#allocation5 + $0x80] sm:$0xff]
    %v86 = vld [vmem:[#allocation5 + $0x88] sm:$0xff]
    %v87 = vld [vmem:[#allocation5 + $0x90] sm:$0xff]
    %v88 = vld [vmem:[#allocation5 + $0x98] sm:$0xff]
    %v89 = vld [vmem:[#allocation5 + $0xa0] sm:$0xff]
    %v90 = vld [vmem:[#allocation5 + $0xa8] sm:$0xff]
    %v91 = vld [vmem:[#allocation5 + $0xb0] sm:$0xff]
    %v92 = vld [vmem:[#allocation5 + $0xb8] sm:$0xff]
    %v93 = vld [vmem:[#allocation5 + $0xc0] sm:$0xff]
    %v94 = vld [vmem:[#allocation5 + $0xc8] sm:$0xff]
    %v95 = vld [vmem:[#allocation5 + $0xd0] sm:$0xff]
    %v96 = vld [vmem:[#allocation5 + $0xd8] sm:$0xff]
    %v97 = vld [vmem:[#allocation5 + $0xe0] sm:$0xff]
    %v98 = vld [vmem:[#allocation5 + $0xe8] sm:$0xff]
    %v99 = vld [vmem:[#allocation5 + $0xf0] sm:$0xff]
    %v100 = vld [vmem:[#allocation5 + $0xf8] sm:$0xff]
    %v101 = vld [vmem:[#allocation5 + $0x100] sm:$0xff]
    %v102 = vld [vmem:[#allocation5 + $0x108] sm:$0xff]
    %v103 = vld [vmem:[#allocation5 + $0x110] sm:$0xff]
    %v104 = vld [vmem:[#allocation5 + $0x118] sm:$0xff]
    %v105 = vld [vmem:[#allocation5 + $0x120] sm:$0xff]
    %v106 = vld [vmem:[#allocation5 + $0x128] sm:$0xff]
    %v107 = vld [vmem:[#allocation5 + $0x130] sm:$0xff]
    %v108 = vld [vmem:[#allocation5 + $0x138] sm:$0xff]
    %v109 = vld [vmem:[#allocation5 + $0x140] sm:$0xff]
    %v110 = vld [vmem:[#allocation5 + $0x148] sm:$0xff]
    %v111 = vld [vmem:[#allocation5 + $0x150] sm:$0xff]
    %v112 = vld [vmem:[#allocation5 + $0x158] sm:$0xff]
    %v113 = vld [vmem:[#allocation5 + $0x160] sm:$0xff]
    %v114 = vld [vmem:[#allocation5 + $0x168] sm:$0xff]
    %v115 = vld [vmem:[#allocation5 + $0x170] sm:$0xff]
    %v116 = vld [vmem:[#allocation5 + $0x178] sm:$0xff]
    %v117 = vunpack.c.l.s8.bf16 %v69
    %v118 = vunpack.c.l.s8.bf16 %v70
    %v119 = vunpack.c.h.s8.bf16 %v69
    %v120 = vunpack.c.h.s8.bf16 %v70
    %v121 = vunpack.c.l.s8.bf16 %v71
    %v122 = vunpack.c.l.s8.bf16 %v72
    %v123 = vunpack.c.h.s8.bf16 %v71
    %v124 = vunpack.c.h.s8.bf16 %v72
    %v125 = vunpack.c.l.s8.bf16 %v73
    %v126 = vunpack.c.l.s8.bf16 %v74
    %v127 = vunpack.c.h.s8.bf16 %v73
    %v128 = vunpack.c.h.s8.bf16 %v74
    %v129 = vunpack.c.l.s8.bf16 %v75
    %v130 = vunpack.c.l.s8.bf16 %v76
    %v131 = vunpack.c.h.s8.bf16 %v75
    %v132 = vunpack.c.h.s8.bf16 %v76
    %v133 = vunpack.c.l.s8.bf16 %v77
    %v134 = vunpack.c.l.s8.bf16 %v78
    %v135 = vunpack.c.h.s8.bf16 %v77
    %v136 = vunpack.c.h.s8.bf16 %v78
    %v137 = vunpack.c.l.s8.bf16 %v79
    %v138 = vunpack.c.l.s8.bf16 %v80
    %v139 = vunpack.c.h.s8.bf16 %v79
    %v140 = vunpack.c.h.s8.bf16 %v80
    %v141 = vunpack.c.l.s8.bf16 %v81
    %v142 = vunpack.c.l.s8.bf16 %v82
    %v143 = vunpack.c.h.s8.bf16 %v81
    %v144 = vunpack.c.h.s8.bf16 %v82
    %v145 = vunpack.c.l.s8.bf16 %v83
    %v146 = vunpack.c.l.s8.bf16 %v84
    %v147 = vunpack.c.h.s8.bf16 %v83
    %v148 = vunpack.c.h.s8.bf16 %v84
    %v149 = vunpack.c.l.s8.bf16 %v85
    %v150 = vunpack.c.l.s8.bf16 %v86
    %v151 = vunpack.c.h.s8.bf16 %v85
    %v152 = vunpack.c.h.s8.bf16 %v86
    %v153 = vunpack.c.l.s8.bf16 %v87
    %v154 = vunpack.c.l.s8.bf16 %v88
    %v155 = vunpack.c.h.s8.bf16 %v87
    %v156 = vunpack.c.h.s8.bf16 %v88
    %v157 = vunpack.c.l.s8.bf16 %v89
    %v158 = vunpack.c.l.s8.bf16 %v90
    %v159 = vunpack.c.h.s8.bf16 %v89
    %v160 = vunpack.c.h.s8.bf16 %v90
    %v161 = vunpack.c.l.s8.bf16 %v91
    %v162 = vunpack.c.l.s8.bf16 %v92
    %v163 = vunpack.c.h.s8.bf16 %v91
    %v164 = vunpack.c.h.s8.bf16 %v92
    %v165 = vunpack.c.l.s8.bf16 %v93
    %v166 = vunpack.c.l.s8.bf16 %v94
    %v167 = vunpack.c.h.s8.bf16 %v93
    %v168 = vunpack.c.h.s8.bf16 %v94
    %v169 = vunpack.c.l.s8.bf16 %v95
    %v170 = vunpack.c.l.s8.bf16 %v96
    %v171 = vunpack.c.h.s8.bf16 %v95
    %v172 = vunpack.c.h.s8.bf16 %v96
    %v173 = vunpack.c.l.s8.bf16 %v97
    %v174 = vunpack.c.l.s8.bf16 %v98
    %v175 = vunpack.c.h.s8.bf16 %v97
    %v176 = vunpack.c.h.s8.bf16 %v98
    %v177 = vunpack.c.l.s8.bf16 %v99
    %v178 = vunpack.c.l.s8.bf16 %v100
    %v179 = vunpack.c.h.s8.bf16 %v99
    %v180 = vunpack.c.h.s8.bf16 %v100
    %v181 = vunpack.c.l.s8.bf16 %v101
    %v182 = vunpack.c.l.s8.bf16 %v102
    %v183 = vunpack.c.h.s8.bf16 %v101
    %v184 = vunpack.c.h.s8.bf16 %v102
    %v185 = vunpack.c.l.s8.bf16 %v103
    %v186 = vunpack.c.l.s8.bf16 %v104
    %v187 = vunpack.c.h.s8.bf16 %v103
    %v188 = vunpack.c.h.s8.bf16 %v104
    %v189 = vunpack.c.l.s8.bf16 %v105
    %v190 = vunpack.c.l.s8.bf16 %v106
    %v191 = vunpack.c.h.s8.bf16 %v105
    %v192 = vunpack.c.h.s8.bf16 %v106
    %v193 = vunpack.c.l.s8.bf16 %v107
    %v194 = vunpack.c.l.s8.bf16 %v108
    %v195 = vunpack.c.h.s8.bf16 %v107
    %v196 = vunpack.c.h.s8.bf16 %v108
    %v197 = vunpack.c.l.s8.bf16 %v109
    %v198 = vunpack.c.l.s8.bf16 %v110
    %v199 = vunpack.c.h.s8.bf16 %v109
    %v200 = vunpack.c.h.s8.bf16 %v110
    %v201 = vunpack.c.l.s8.bf16 %v111
    %v202 = vunpack.c.l.s8.bf16 %v112
    %v203 = vunpack.c.h.s8.bf16 %v111
    %v204 = vunpack.c.h.s8.bf16 %v112
    %v205 = vunpack.c.l.s8.bf16 %v113
    %v206 = vunpack.c.l.s8.bf16 %v114
    %v207 = vunpack.c.h.s8.bf16 %v113
    %v208 = vunpack.c.h.s8.bf16 %v114
    %v209 = vunpack.c.l.s8.bf16 %v115
    %v210 = vunpack.c.l.s8.bf16 %v116
    %v211 = vunpack.c.h.s8.bf16 %v115
    %v212 = vunpack.c.h.s8.bf16 %v116
    %213 = vmatprep.subr.bf16.mxu0 %v118
    %214 = vmatpush1.bf16.msra.mxu0 %v117
    %215 = vmatprep.subr.bf16.mxu0 %v120
    %216 = vmatpush1.bf16.msra.mxu0 %v119
    %217 = vmatprep.subr.bf16.mxu0 %v122
    %218 = vmatpush1.bf16.msra.mxu0 %v121
    %219 = vmatprep.subr.bf16.mxu0 %v124
    %220 = vmatpush1.bf16.msra.mxu0 %v123
    %221 = vmatprep.subr.bf16.mxu0 %v126
    %222 = vmatpush1.bf16.msra.mxu0 %v125
    %223 = vmatprep.subr.bf16.mxu0 %v128
    %224 = vmatpush1.bf16.msra.mxu0 %v127
    %225 = vmatprep.subr.bf16.mxu0 %v130
    %226 = vmatpush1.bf16.msra.mxu0 %v129
    %227 = vmatprep.subr.bf16.mxu0 %v132
    %228 = vmatpush1.bf16.msra.mxu0 %v131
    %229 = vmatprep.subr.bf16.mxu0 %v134
    %230 = vmatpush1.bf16.msra.mxu0 %v133
    %231 = vmatprep.subr.bf16.mxu0 %v136
    %232 = vmatpush1.bf16.msra.mxu0 %v135
    %233 = vmatprep.subr.bf16.mxu0 %v138
    %234 = vmatpush1.bf16.msra.mxu0 %v137
    %235 = vmatprep.subr.bf16.mxu0 %v140
    %236 = vmatpush1.bf16.msra.mxu0 %v139
    %237 = vmatprep.subr.bf16.mxu0 %v142
    %238 = vmatpush1.bf16.msra.mxu0 %v141
    %239 = vmatprep.subr.bf16.mxu0 %v144
    %240 = vmatpush1.bf16.msra.mxu0 %v143
    %241 = vmatprep.subr.bf16.mxu0 %v146
    %242 = vmatpush1.bf16.msra.mxu0 %v145
    %243 = vmatprep.subr.bf16.mxu0 %v148
    %244 = vmatpush1.bf16.msra.mxu0 %v147
    %245 = vmatprep.mubr.bf16.mxu0 %v58
    %246 = vmatmul.mubr.bf16.gmra.mrb[0].mxu0 %v57
    %v247 = vpop.f32.mrb[0].mxu0
    %v248 = vadd.f32 0.0, %v247
    %v249 = vpop.f32.mrb[0].mxu0
    %v250 = vadd.f32 0.0, %v249
    %v251 = vpop.f32.mrb[0].mxu0
    %v252 = vadd.f32 0.0, %v251
    %v253 = vpop.f32.mrb[0].mxu0
    %v254 = vadd.f32 0.0, %v253
    %255 = vmatprep.mubr.bf16.mxu0 %v64
    %256 = vmatmul.mubr.bf16.gmra.mrb[0].mxu0 %v63
    %v257 = vpop.f32.mrb[0].mxu0
    %v258 = vadd.f32 0.0, %v257
    %v259 = vpop.f32.mrb[0].mxu0
    %v260 = vadd.f32 0.0, %v259
    %v261 = vpop.f32.mrb[0].mxu0
    %v262 = vadd.f32 0.0, %v261
    %v263 = vpop.f32.mrb[0].mxu0
    %v264 = vadd.f32 0.0, %v263
    %265 = vdwg.mxu0
    %266 = vmatprep.subr.bf16.mxu0 %v150
    %267 = vmatpush1.bf16.msra.mxu0 %v149
    %268 = vmatprep.subr.bf16.mxu0 %v152
    %269 = vmatpush1.bf16.msra.mxu0 %v151
    %270 = vmatprep.subr.bf16.mxu0 %v154
    %271 = vmatpush1.bf16.msra.mxu0 %v153
    %272 = vmatprep.subr.bf16.mxu0 %v156
    %273 = vmatpush1.bf16.msra.mxu0 %v155
    %274 = vmatprep.subr.bf16.mxu0 %v158
    %275 = vmatpush1.bf16.msra.mxu0 %v157
    %276 = vmatprep.subr.bf16.mxu0 %v160
    %277 = vmatpush1.bf16.msra.mxu0 %v159
    %278 = vmatprep.subr.bf16.mxu0 %v162
    %279 = vmatpush1.bf16.msra.mxu0 %v161
    %280 = vmatprep.subr.bf16.mxu0 %v164
    %281 = vmatpush1.bf16.msra.mxu0 %v163
    %282 = vmatprep.subr.bf16.mxu0 %v166
    %283 = vmatpush1.bf16.msra.mxu0 %v165
    %284 = vmatprep.subr.bf16.mxu0 %v168
    %285 = vmatpush1.bf16.msra.mxu0 %v167
    %286 = vmatprep.subr.bf16.mxu0 %v170
    %287 = vmatpush1.bf16.msra.mxu0 %v169
    %288 = vmatprep.subr.bf16.mxu0 %v172
    %289 = vmatpush1.bf16.msra.mxu0 %v171
    %290 = vmatprep.subr.bf16.mxu0 %v174
    %291 = vmatpush1.bf16.msra.mxu0 %v173
    %292 = vmatprep.subr.bf16.mxu0 %v176
    %293 = vmatpush1.bf16.msra.mxu0 %v175
    %294 = vmatprep.subr.bf16.mxu0 %v178
    %295 = vmatpush1.bf16.msra.mxu0 %v177
    %296 = vmatprep.subr.bf16.mxu0 %v180
    %297 = vmatpush1.bf16.msra.mxu0 %v179
    %298 = vmatprep.mubr.bf16.mxu0 %v60
    %299 = vmatmul.mubr.bf16.gmra.mrb[0].mxu0 %v59
    %v300 = vpop.f32.mrb[0].mxu0
    %v301 = vadd.f32 %v248, %v300
    %v302 = vpop.f32.mrb[0].mxu0
    %v303 = vadd.f32 %v250, %v302
    %v304 = vpop.f32.mrb[0].mxu0
    %v305 = vadd.f32 %v252, %v304
    %v306 = vpop.f32.mrb[0].mxu0
    %v307 = vadd.f32 %v254, %v306
    %308 = vmatprep.mubr.bf16.mxu0 %v66
    %309 = vmatmul.mubr.bf16.gmra.mrb[0].mxu0 %v65
    %v310 = vpop.f32.mrb[0].mxu0
    %v311 = vadd.f32 %v258, %v310
    %v312 = vpop.f32.mrb[0].mxu0
    %v313 = vadd.f32 %v260, %v312
    %v314 = vpop.f32.mrb[0].mxu0
    %v315 = vadd.f32 %v262, %v314
    %v316 = vpop.f32.mrb[0].mxu0
    %v317 = vadd.f32 %v264, %v316
    %318 = vdwg.mxu0
    %319 = vmatprep.subr.bf16.mxu0 %v182
    %320 = vmatpush1.bf16.msra.mxu0 %v181
    %321 = vmatprep.subr.bf16.mxu0 %v184
    %322 = vmatpush1.bf16.msra.mxu0 %v183
    %323 = vmatprep.subr.bf16.mxu0 %v186
    %324 = vmatpush1.bf16.msra.mxu0 %v185
    %325 = vmatprep.subr.bf16.mxu0 %v188
    %326 = vmatpush1.bf16.msra.mxu0 %v187
    %327 = vmatprep.subr.bf16.mxu0 %v190
    %328 = vmatpush1.bf16.msra.mxu0 %v189
    %329 = vmatprep.subr.bf16.mxu0 %v192
    %330 = vmatpush1.bf16.msra.mxu0 %v191
    %331 = vmatprep.subr.bf16.mxu0 %v194
    %332 = vmatpush1.bf16.msra.mxu0 %v193
    %333 = vmatprep.subr.bf16.mxu0 %v196
    %334 = vmatpush1.bf16.msra.mxu0 %v195
    %335 = vmatprep.subr.bf16.mxu0 %v198
    %336 = vmatpush1.bf16.msra.mxu0 %v197
    %337 = vmatprep.subr.bf16.mxu0 %v200
    %338 = vmatpush1.bf16.msra.mxu0 %v199
    %339 = vmatprep.subr.bf16.mxu0 %v202
    %340 = vmatpush1.bf16.msra.mxu0 %v201
    %341 = vmatprep.subr.bf16.mxu0 %v204
    %342 = vmatpush1.bf16.msra.mxu0 %v203
    %343 = vmatprep.subr.bf16.mxu0 %v206
    %344 = vmatpush1.bf16.msra.mxu0 %v205
    %345 = vmatprep.subr.bf16.mxu0 %v208
    %346 = vmatpush1.bf16.msra.mxu0 %v207
    %347 = vmatprep.subr.bf16.mxu0 %v210
    %348 = vmatpush1.bf16.msra.mxu0 %v209
    %349 = vmatprep.subr.bf16.mxu0 %v212
    %350 = vmatpush1.bf16.msra.mxu0 %v211
    %351 = vmatprep.mubr.bf16.mxu0 %v62
    %352 = vmatmul.mubr.bf16.gmra.mrb[0].mxu0 %v61
    %v353 = vpop.f32.mrb[0].mxu0
    %v354 = vadd.f32 %v301, %v353
    %v355 = vpop.f32.mrb[0].mxu0
    %v356 = vadd.f32 %v303, %v355
    %v357 = vpop.f32.mrb[0].mxu0
    %v358 = vadd.f32 %v305, %v357
    %v359 = vpop.f32.mrb[0].mxu0
    %v360 = vadd.f32 %v307, %v359
    %361 = vmatprep.mubr.bf16.mxu0 %v68
    %362 = vmatmul.mubr.bf16.gmra.mrb[0].mxu0 %v67
    %v363 = vpop.f32.mrb[0].mxu0
    %v364 = vadd.f32 %v311, %v363
    %v365 = vpop.f32.mrb[0].mxu0
    %v366 = vadd.f32 %v313, %v365
    %v367 = vpop.f32.mrb[0].mxu0
    %v368 = vadd.f32 %v315, %v367
    %v369 = vpop.f32.mrb[0].mxu0
    %v370 = vadd.f32 %v317, %v369
    %371 = vdwg.mxu0
    %v372 = vld [vmem:[%s2] sm:$0x3]
    %v373 = vcvt.s32.f32 %v372
    %v374 = vmul.f32 %v373, -28.0
    %v376 = vlaneseq
    %v377 = vshrl.u32 %v376, 7
    %v378 = vsub.s32 0, %v377
    %v379 = vrot.slane %v374, %v378
    %v380 = vlaneseq
    %v381 = vshrl.u32 %v380, 7
    %v382 = vsub.s32 1, %v381
    %v383 = vrot.slane %v374, %v382
    %v386 = vsub.f32 %v354, %v379
    %v387 = vsub.f32 %v356, %v383
    %v388 = vsub.f32 %v358, %v379
    %v389 = vsub.f32 %v360, %v383
    %v390 = vsub.f32 %v364, %v379
    %v391 = vsub.f32 %v366, %v383
    %v392 = vsub.f32 %v368, %v379
    %v393 = vsub.f32 %v370, %v383
    %v394 = vmul.f32 %v386, 0.05
    %v395 = vmul.f32 %v387, 0.05
    %v396 = vmul.f32 %v388, 0.05
    %v397 = vmul.f32 %v389, 0.05
    %v398 = vmul.f32 %v390, 0.05
    %v399 = vmul.f32 %v391, 0.05
    %v400 = vmul.f32 %v392, 0.05
    %v401 = vmul.f32 %v393, 0.05
    %v402 = vld [vmem:[%s3] sm:$0x3]
    %v404 = vlaneseq
    %v405 = vshrl.u32 %v404, 7
    %v406 = vsub.s32 0, %v405
    %v407 = vrot.slane %v402, %v406
    %v408 = vlaneseq
    %v409 = vshrl.u32 %v408, 7
    %v410 = vsub.s32 1, %v409
    %v411 = vrot.slane %v402, %v410
    %v414 = vadd.f32 %v394, %v407
    %v415 = vadd.f32 %v395, %v411
    %v416 = vadd.f32 %v396, %v407
    %v417 = vadd.f32 %v397, %v411
    %v418 = vadd.f32 %v398, %v407
    %v419 = vadd.f32 %v399, %v411
    %v420 = vadd.f32 %v400, %v407
    %v421 = vadd.f32 %v401, %v411
    %v422 = vround.ne.pseudo %v414
    %v423 = vround.ne.pseudo %v415
    %v424 = vround.ne.pseudo %v416
    %v425 = vround.ne.pseudo %v417
    %v426 = vround.ne.pseudo %v418
    %v427 = vround.ne.pseudo %v419
    %v428 = vround.ne.pseudo %v420
    %v429 = vround.ne.pseudo %v421
    %v430 = vadd.f32 %v422, 0.0
    %v431 = vadd.f32 %v423, 0.0
    %v432 = vadd.f32 %v424, 0.0
    %v433 = vadd.f32 %v425, 0.0
    %v434 = vadd.f32 %v426, 0.0
    %v435 = vadd.f32 %v427, 0.0
    %v436 = vadd.f32 %v428, 0.0
    %v437 = vadd.f32 %v429, 0.0
    %v438 = vmax.f32 %v430, 0.0
    %v439 = vmax.f32 %v431, 0.0
    %v440 = vmax.f32 %v432, 0.0
    %v441 = vmax.f32 %v433, 0.0
    %v442 = vmax.f32 %v434, 0.0
    %v443 = vmax.f32 %v435, 0.0
    %v444 = vmax.f32 %v436, 0.0
    %v445 = vmax.f32 %v437, 0.0
    %v446 = vmin.f32 %v438, 255.0
    %v447 = vmin.f32 %v439, 255.0
    %v448 = vmin.f32 %v440, 255.0
    %v449 = vmin.f32 %v441, 255.0
    %v450 = vmin.f32 %v442, 255.0
    %v451 = vmin.f32 %v443, 255.0
    %v452 = vmin.f32 %v444, 255.0
    %v453 = vmin.f32 %v445, 255.0
    %v454 = vtrunc.f32 %v446
    %v455 = vtrunc.f32 %v447
    %v456 = vtrunc.f32 %v448
    %v457 = vtrunc.f32 %v449
    %v458 = vtrunc.f32 %v450
    %v459 = vtrunc.f32 %v451
    %v460 = vtrunc.f32 %v452
    %v461 = vtrunc.f32 %v453
    %v462 = vpack.c.f32.eXmY %v454, %v456, 56
    %v466 = vpack.c.f32.eXmY %v458, %v460, 56
    %v470 = vpack.c.b8 %v466, %v462
    %v472 = vpack.c.f32.eXmY %v455, %v457, 56
    %v476 = vpack.c.f32.eXmY %v459, %v461, 56
    %v480 = vpack.c.b8 %v476, %v472
    %482 = vst [vmem:[#allocation7] sm:$0xff] %v470
    %483 = vst [vmem:[#allocation7 + $0x8] sm:$0xff] %v480
    // Predicated region
    $region26: #{tpu_custom_call.1} parent=1 // pred_check
      _
    $region27: #{tpu_custom_call.1} parent=1 // pred_check_branch
      %485 = sbr.rel (0) target = $region29
    $region28: #{tpu_custom_call.1} parent=1 // pred_region
      %s487 = ssub.s32 256, 256
      %488 = vsyncadd [#allocation4], %s487
      %s490 = sshll.u32 [#allocation7], 4
      %s491 = int_to_ptr.vmem [resolvable:$true] %s490
      %493 = dma.vmem_to_hbm [thread:$0]  %s491, 256, %s4, [#allocation4]
    $region29: #{tpu_custom_call.1} parent=1 // pred_fallthru
      _
    // Predicated region
    $region30: #{tpu_custom_call.1} parent=1 // pred_check
      _
    $region31: #{tpu_custom_call.1} parent=1 // pred_check_branch
      %495 = sbr.rel (0) target = $region33
    $region32: #{tpu_custom_call.1} parent=1 // pred_region
      %496 = dma.done [#allocation4], 256
    $region33: #{tpu_custom_call.1} parent=1 // pred_fallthru
      _
    %497 = vsyncpa [#allocation3], 1
    %498 = vsyncpa [#allocation6], 1
    %499 = vsyncpa [#allocation4], 1

</llo_original>
